<compile_context>
chip_gen: v5e
topology: v5e:2x2
jax: 0.10.0
libtpu: 0.0.40
codegen_flags: <defaults>
</compile_context>

<pallas_src>
import functools

import jax
import jax.numpy as jnp
from jax.experimental import pallas as pl
from jax.experimental.pallas import tpu as pltpu


# ----------------------- tiling helper -----------------------

def _pick_row_tile(M, row_bytes, budget=8 << 20):
    """Largest row tile t (multiple of 16, t | M) whose double-buffered in/out
    footprint fits `budget`; prefers >=2 grid steps (feeds both v7x TCs).
    Falls back to the full extent for tiny / odd M (full dims are always
    legal block dims)."""
    cap = max(16, budget // (2 * max(row_bytes, 1)))
    divs = [d for d in range(16, M + 1, 16) if M % d == 0 and d <= cap]
    if not divs:
        return M
    multi = [d for d in divs if M // d >= 2]
    return max(multi) if multi else max(divs)


_VMEM_LIMIT = 32 * 1024 * 1024  # explicit; safe on v5e/v6e/v7x


# ----------------------- Pallas kernels -----------------------

def _conv_mm_kernel(x_ref, w_ref, b_ref, o_ref):
    # im2col conv stage: bf16 MXU matmul, f32 accumulate, f32 bias + SiLU.
    acc = jnp.dot(x_ref[...], w_ref[...], preferred_element_type=jnp.float32)
    acc = acc + b_ref[...]
    acc = acc * jax.nn.sigmoid(acc)            # SiLU on VPU/EUP, f32
    o_ref[...] = acc.astype(o_ref.dtype)


def conv_mm(cols, w, b):
    """cols: (M, K) bf16, w: (K, N) bf16, b: (N,) f32 -> (M, N) bf16."""
    M, K = cols.shape
    N = w.shape[1]
    row_bytes = K * cols.dtype.itemsize + N * 2     # in + bf16 out, per row
    tm = _pick_row_tile(M, row_bytes)
    return pl.pallas_call(
        _conv_mm_kernel,
        out_shape=jax.ShapeDtypeStruct((M, N), jnp.bfloat16),
        grid=(M // tm,),
        in_specs=[
            pl.BlockSpec((tm, K), lambda i: (i, 0)),
            pl.BlockSpec((K, N), lambda i: (0, 0)),
            pl.BlockSpec((1, N), lambda i: (0, 0)),
        ],
        out_specs=pl.BlockSpec((tm, N), lambda i: (i, 0)),
        compiler_params=pltpu.CompilerParams(
            dimension_semantics=("parallel",),
            vmem_limit_bytes=_VMEM_LIMIT),
    )(cols, w, b.reshape(1, N))


def _tail_kernel(x_ref, g_ref, w2_ref, b2_ref, wh_ref, bh_ref,
                 colsel_ref, avec_ref, z_ref, p_ref, *, stride):
    """conv2 (im2col row tile) -> SiLU -> 1x1 Detect head -> YOLOv5 decode.

    x_ref:   (tm, 9*c1) bf16 im2col rows (row order = b, y, x)
    g_ref:   (tm, 2)    f32 per-row (gx, gy)
    colsel:  (1, Npad)  int32 per-column role: 0=x, 1=y, 2=w/h, 3=sigmoid/pad
    avec:    (1, Npad)  f32 anchor value for w/h columns, 0 elsewhere
    z_ref:   (tm, Npad) f32 decoded detections (lane-dense, padded cols junk)
    p_ref:   (tm, Npad) f32 raw head logits (for the val=True path)
    """
    h = jnp.dot(x_ref[...], w2_ref[...], preferred_element_type=jnp.float32)
    h = h + b2_ref[...]
    h = h * jax.nn.sigmoid(h)                                   # SiLU, f32
    p = jnp.dot(h.astype(wh_ref.dtype), wh_ref[...],
                preferred_element_type=jnp.float32) + bh_ref[...]
    p_ref[...] = p

    s = jax.nn.sigmoid(p)
    colsel = colsel_ref[...]
    gx = g_ref[:, 0:1]
    gy = g_ref[:, 1:2]
    g = jnp.where(colsel == 0, gx, gy)                          # (tm, Npad)
    xy = (s * 2.0 - 0.5 + g) * stride
    wh = (s * 2.0) ** 2 * avec_ref[...]
    z_ref[...] = jnp.where(colsel <= 1, xy, jnp.where(colsel == 2, wh, s))


def fused_tail(cols2, g2, w2, b2, wh, bh, colsel, avec, stride):
    """Fused conv2 + head + decode.  Returns (decoded, raw_logits), padded to
    Npad output channels (lane-dense stores)."""
    M, K2 = cols2.shape
    C2 = w2.shape[1]
    Npad = wh.shape[1]
    row_bytes = (K2 * cols2.dtype.itemsize + 2 * g2.dtype.itemsize
                 + 2 * Npad * 4)
    tm = _pick_row_tile(M, row_bytes)
    return pl.pallas_call(
        functools.partial(_tail_kernel, stride=float(stride)),
        out_shape=(jax.ShapeDtypeStruct((M, Npad), jnp.float32),
                   jax.ShapeDtypeStruct((M, Npad), jnp.float32)),
        grid=(M // tm,),
        in_specs=[
            pl.BlockSpec((tm, K2), lambda i: (i, 0)),
            pl.BlockSpec((tm, 2), lambda i: (i, 0)),
            pl.BlockSpec((K2, C2), lambda i: (0, 0)),
            pl.BlockSpec((1, C2), lambda i: (0, 0)),
            pl.BlockSpec((C2, Npad), lambda i: (0, 0)),
            pl.BlockSpec((1, Npad), lambda i: (0, 0)),
            pl.BlockSpec((1, Npad), lambda i: (0, 0)),
            pl.BlockSpec((1, Npad), lambda i: (0, 0)),
        ],
        out_specs=(pl.BlockSpec((tm, Npad), lambda i: (i, 0)),
                   pl.BlockSpec((tm, Npad), lambda i: (i, 0))),
        compiler_params=pltpu.CompilerParams(
            dimension_semantics=("parallel",),
            vmem_limit_bytes=_VMEM_LIMIT),
    )(cols2, g2, w2, b2.reshape(1, C2), wh, bh.reshape(1, Npad), colsel, avec)


# ----------------------- glue (plain JAX) -----------------------

def im2col(x, k=3, s=2, p=1):
    """NHWC -> (B*Ho*Wo, k*k*C) patch matrix (row-major over (di, dj, cin))."""
    B, H, W, C = x.shape
    xp = jnp.pad(x, ((0, 0), (p, p), (p, p), (0, 0)))
    Ho = (H + 2 * p - k) // s + 1
    Wo = (W + 2 * p - k) // s + 1
    patches = []
    for di in range(k):
        for dj in range(k):
            patches.append(xp[:, di:di + s * Ho:s, dj:dj + s * Wo:s, :])
    cols = jnp.concatenate(patches, axis=-1)
    return cols.reshape(B * Ho * Wo, k * k * C), Ho, Wo


def init_params(key, cin, c1, c2, na, no, npad):
    ks = jax.random.split(key, 6)

    def wconv(k, kh, kw, ci, co):
        # (co, ci, kh, kw) conv weight permuted to (kh, kw, ci, co), flattened
        fan_in = kh * kw * ci
        w = jax.random.normal(k, (fan_in, co), jnp.float32) / jnp.sqrt(fan_in)
        return w.astype(jnp.bfloat16)            # bf16 MXU operands

    nao = na * no
    wh = wconv(ks[4], 1, 1, c2, nao)
    bh = 0.1 * jax.random.normal(ks[5], (nao,), jnp.float32)
    wh_pad = jnp.zeros((c2, npad), jnp.bfloat16).at[:, :nao].set(wh)
    bh_pad = jnp.zeros((npad,), jnp.float32).at[:nao].set(bh)
    return dict(
        w1=wconv(ks[0], 3, 3, cin, c1),
        b1=0.1 * jax.random.normal(ks[1], (c1,), jnp.float32),
        w2=wconv(ks[2], 3, 3, c1, c2),
        b2=0.1 * jax.random.normal(ks[3], (c2,), jnp.float32),
        wh=wh_pad, bh=bh_pad,
    )


class DetectMultiBackendPallas:
    """Pallas re-implementation of DetectMultiBackend.forward (val=False path)."""

    NPAD = 128  # lane-dense padded head width

    def __init__(self, key, nc=4, na=3):
        self.nc, self.na, self.no = nc, na, nc + 5
        self.c1, self.c2 = 16, 32
        self.stride = 4                                    # two stride-2 convs
        self.names = [f"class{i}" for i in range(nc)]
        self.anchors = jnp.array([[10., 13.], [16., 30.], [33., 23.]],
                                 jnp.float32)
        self.params = init_params(key, 3, self.c1, self.c2, na, self.no,
                                  self.NPAD)

        # per-column decode constants for the padded (Npad) head output
        cols = jnp.arange(self.NPAD)
        within = cols % self.no
        aidx = jnp.clip(cols // self.no, 0, self.na - 1)
        valid = cols < self.na * self.no
        colsel = jnp.where(~valid, 3,
                 jnp.where(within == 0, 0,
                 jnp.where(within == 1, 1,
                 jnp.where(within < 4, 2, 3))))
        awh = self.anchors[aidx, jnp.clip(within - 2, 0, 1)]
        self.colsel = colsel.astype(jnp.int32).reshape(1, self.NPAD)
        self.avec = jnp.where(colsel == 2, awh, 0.0
                              ).astype(jnp.float32).reshape(1, self.NPAD)

    def forward(self, im, augment=False, visualize=False, val=False):
        # im: NCHW float32 (PyTorch convention)
        B = im.shape[0]
        x = jnp.transpose(im, (0, 2, 3, 1)).astype(jnp.bfloat16)   # NHWC bf16

        # stage 1: 3x3 stride-2 Conv + SiLU
        cols, h1, w1 = im2col(x, 3, 2, 1)
        x = conv_mm(cols, self.params["w1"], self.params["b1"]
                    ).reshape(B, h1, w1, self.c1)

        # stage 2 + head + decode, fused in one pallas_call
        cols2, ny, nx = im2col(x, 3, 2, 1)
        gy, gx = jnp.meshgrid(jnp.arange(ny, dtype=jnp.float32),
                              jnp.arange(nx, dtype=jnp.float32), indexing="ij")
        g2 = jnp.broadcast_to(jnp.stack([gx, gy], -1)[None],
                              (B, ny, nx, 2)).reshape(B * ny * nx, 2)
        z, p = fused_tail(cols2, g2, self.params["w2"], self.params["b2"],
                          self.params["wh"], self.params["bh"],
                          self.colsel, self.avec, self.stride)

        nao = self.na * self.no
        # (B, ny, nx, na, no) -> (B, na, ny, nx, no) -> (B, na*ny*nx, no)
        z = z[:, :nao].reshape(B, ny, nx, self.na, self.no
                               ).transpose(0, 3, 1, 2, 4)
        y0 = z.reshape(B, self.na * ny * nx, self.no)
        if val:
            praw = p[:, :nao].reshape(B, ny, nx, self.na, self.no
                                      ).transpose(0, 3, 1, 2, 4)
            return (y0, praw)
        return y0

    __call__ = forward

    def warmup(self, imgsz=(1, 3, 64, 64)):
        # TODO(synk): original default is (1, 3, 640, 640); kept small here.
        self.forward(jnp.zeros(imgsz, jnp.float32))


def reference_forward(model, im):
    """Pure-JAX reference of the same synthetic model (same bf16/f32 mix)."""
    prm = model.params
    x = jnp.transpose(im, (0, 2, 3, 1)).astype(jnp.bfloat16)

    def conv(x, w, b):
        cols, Ho, Wo = im2col(x, 3, 2, 1)
        h = jnp.dot(cols, w, preferred_element_type=jnp.float32) + b
        h = h * jax.nn.sigmoid(h)
        return h.astype(jnp.bfloat16).reshape(x.shape[0], Ho, Wo, -1)

    x = conv(x, prm["w1"], prm["b1"])
    x = conv(x, prm["w2"], prm["b2"])
    B, ny, nx, _ = x.shape
    nao = model.na * model.no
    h = jnp.dot(x.reshape(B * ny * nx, model.c2), prm["wh"][:, :nao],
                preferred_element_type=jnp.float32) + prm["bh"][:nao]
    p = h.reshape(B, ny, nx, model.na, model.no).transpose(0, 3, 1, 2, 4)
    s = jax.nn.sigmoid(p)
    gy, gx = jnp.meshgrid(jnp.arange(ny, dtype=jnp.float32),
                          jnp.arange(nx, dtype=jnp.float32), indexing="ij")
    grid = jnp.stack([gx, gy], -1)[None, None]
    ag = model.anchors[None, :, None, None, :]
    xy = (s[..., :2] * 2 - 0.5 + grid) * model.stride
    wh = (s[..., 2:4] * 2) ** 2 * ag
    return jnp.concatenate([xy, wh, s[..., 4:]], -1).reshape(B, -1, model.no)


if __name__ == "__main__":
    key = jax.random.PRNGKey(0)
    kp, kx = jax.random.split(key)
    model = DetectMultiBackendPallas(kp, nc=4, na=3)

    # small NCHW input, like the PyTorch module's `im`
    im = jax.random.normal(kx, (2, 3, 32, 32), jnp.float32)

    out = model(im)                       # val=False path -> y[0]
    out = jax.block_until_ready(out)

    assert out.shape == (2, 3 * 8 * 8, 9), out.shape
    ref = reference_forward(model, im)
    err = float(jnp.max(jnp.abs(out - ref)))
    assert jnp.allclose(out, ref, rtol=2e-2, atol=2e-2), err

    print("KERNEL_OK")
</pallas_src>

<mosaic_0001>
module attributes {stable_mosaic.version = 11 : i64} {
  func.func @_conv_mm_kernel(%arg0: i32, %arg1: memref<256x27xbf16, #tpu.memory_space<vmem>>, %arg2: memref<27x16xbf16, #tpu.memory_space<vmem>>, %arg3: memref<1x16xf32, #tpu.memory_space<vmem>>, %arg4: memref<256x16xbf16, #tpu.memory_space<vmem>>) attributes {dimension_semantics = [#tpu.dimension_semantics<parallel>], iteration_bounds = array<i64: 2>, scalar_prefetch = 0 : i64, scratch_operands = 0 : i64, tpu.core_type = #tpu.core_type<tc>, window_params = [{transform_indices = @transform_0, window_bounds = array<i64: 256, 27>}, {pipeline_mode = #tpu.pipeline_mode<synchronous>, transform_indices = @transform_1, window_bounds = array<i64: 27, 16>}, {pipeline_mode = #tpu.pipeline_mode<synchronous>, transform_indices = @transform_2, window_bounds = array<i64: 1, 16>}, {transform_indices = @transform_3, window_bounds = array<i64: 256, 16>}]} {
    %c0 = arith.constant 0 : index
    %c0_0 = arith.constant 0 : index
    %0 = vector.load %arg1[%c0, %c0_0] : memref<256x27xbf16, #tpu.memory_space<vmem>>, vector<256x27xbf16>
    %c0_1 = arith.constant 0 : index
    %c0_2 = arith.constant 0 : index
    %1 = vector.load %arg2[%c0_1, %c0_2] : memref<27x16xbf16, #tpu.memory_space<vmem>>, vector<27x16xbf16>
    %cst = arith.constant dense<0.000000e+00> : vector<256x16xf32>
    %2 = tpu.matmul %0, %1, %cst {dimension_numbers = #tpu.dot_dimension_numbers<[1], [0], [0], [1], [0, 0, 1, 1], [], []>} : vector<256x27xbf16>, vector<27x16xbf16>, vector<256x16xf32> -> vector<256x16xf32>
    %c0_3 = arith.constant 0 : index
    %c0_4 = arith.constant 0 : index
    %3 = vector.load %arg3[%c0_3, %c0_4] : memref<1x16xf32, #tpu.memory_space<vmem>>, vector<1x16xf32>
    %4 = vector.broadcast %3 : vector<1x16xf32> to vector<256x16xf32>
    %5 = arith.addf %2, %4 : vector<256x16xf32>
    %6 = arith.negf %5 : vector<256x16xf32>
    %7 = math.exp %6 : vector<256x16xf32>
    %cst_5 = arith.constant 1.000000e+00 : f32
    %8 = vector.broadcast %cst_5 : f32 to vector<256x16xf32>
    %9 = arith.addf %8, %7 : vector<256x16xf32>
    %10 = arith.divf %8, %9 : vector<256x16xf32>
    %11 = arith.mulf %5, %10 : vector<256x16xf32>
    %12 = arith.truncf %11 : vector<256x16xf32> to vector<256x16xbf16>
    %c0_6 = arith.constant 0 : index
    %c0_7 = arith.constant 0 : index
    %13 = vector.load %arg4[%c0_6, %c0_7] : memref<256x16xbf16, #tpu.memory_space<vmem>>, vector<256x16xbf16>
    tpu.vector_store %arg4[%c0_6, %c0_7], %12 {strides = array<i32>} : memref<256x16xbf16, #tpu.memory_space<vmem>>, vector<256x16xbf16>,
    return
  }
  func.func @transform_0(%arg0: i32) -> (i32, i32) {
    %c0_i32 = arith.constant 0 : i32
    %c0_i32_0 = arith.constant 0 : i32
    return %arg0, %c0_i32 : i32, i32
  }
  func.func @transform_1(%arg0: i32) -> (i32, i32) {
    %c0_i32 = arith.constant 0 : i32
    %c0_i32_0 = arith.constant 0 : i32
    %c0_i32_1 = arith.constant 0 : i32
    return %c0_i32, %c0_i32_0 : i32, i32
  }
  func.func @transform_2(%arg0: i32) -> (i32, i32) {
    %c0_i32 = arith.constant 0 : i32
    %c0_i32_0 = arith.constant 0 : i32
    %c0_i32_1 = arith.constant 0 : i32
    return %c0_i32, %c0_i32_0 : i32, i32
  }
  func.func @transform_3(%arg0: i32) -> (i32, i32) {
    %c0_i32 = arith.constant 0 : i32
    %c0_i32_0 = arith.constant 0 : i32
    return %arg0, %c0_i32 : i32, i32
  }
}

</mosaic_0001>

<llo_original>
// kernel: tpu_custom_call.1
$region0: #{tpu_custom_call.1}
  #allocation0 [shape = 'u32[]', space=smem, size = 0x4, offset = 0x4, fixed_abs, tag = 'smem constant byte address 0x4 - core index']
  #allocation1 [shape = 'u32[72,128]{1,0:T(1,128)}', space=vmem, size = 0x9000, scoped, tag = 'internal scratch']
  %s0 = inlined_call_operand.vmem [shape: bf16[512,27], index: 0, kind: input, shape index: {}]
  %s1 = inlined_call_operand.vmem [shape: bf16[27,16], index: 1, kind: input, shape index: {}]
  %s2 = inlined_call_operand.vmem [shape: f32[1,16], index: 2, kind: input, shape index: {}]
  %s3 = inlined_call_operand.vmem [shape: bf16[512,16], index: 3, kind: output, shape index: {}]
  %s4 = sld [smem:[#allocation0]]
  $region45: #{tpu_custom_call.1} parent=0
    _
  %s6 = ssub.s32 1, %s4
  %s7 = scalar_select 0, %s6, %s4
  loop: start=0, step=1, limit=4
  $region2: #{tpu_custom_call.1} parent=0 // loop_pre_header
    _
  $region3: #{tpu_custom_call.1} parent=0 // loop_header
    %s9 = sphi 0, %s13
    %p10 = scmp.ge.s32.totalorder %s9, 4
    %s19 = sphi 0, %s21
    %s22 = sphi 0, %s19
    %s23 = sphi 0, %s22
    %s39 = sphi 0, %s23
    %s43 = sphi 0, %s43
    %s45 = sphi 0, %s43
    %s46 = sphi 0, %s45
    %s60 = sphi 0, %s46
    %s64 = sphi 0, %s64
    %s66 = sphi 0, %s64
    %s67 = sphi 0, %s66
    %s81 = sphi 0, %s67
    %s87 = sphi 0, %s89
    %s90 = sphi 0, %s87
    %s91 = sphi 0, %s90
    %s107 = sphi 0, %s91
  $region4: #{tpu_custom_call.1} parent=0 // loop_header_branch
    %12 = sbr.rel (%p10) target = $region8
  $region5: #{tpu_custom_call.1} parent=0 // loop_body
    %s14 = ssub.s32 %s9, 1
    %s15 = ssub.s32 %s9, 2
    %s16 = sadd.s32 %s9, 1
    %s17 = ssub.s32 %s9, %s16
    %p18 = scmp.eq.s32.totalorder %s17, 0
    %s20 = sadd.s32 %s19, 1
    %s21 = scalar_select %p18, %s19, %s20
    %p24 = pneg %p18
    %p25 = scmp.eq.s32.totalorder %s9, 1
    %p26 = por %p24, %p25
    %p27 = scmp.ne.s32.totalorder %s19, %s22
    %p28 = scmp.eq.s32.totalorder %s9, 0
    %p29 = por %p27, %p28
    %p30 = scmp.ne.s32.totalorder %s19, %s22
    %p31 = scmp.eq.s32.totalorder %s14, 1
    %p32 = por %p30, %p31
    %p33 = scmp.ne.s32.totalorder %s22, %s23
    %p34 = scmp.eq.s32.totalorder %s14, 0
    %p35 = por %p33, %p34
    %p36 = scmp.ne.s32.totalorder %s22, %s23
    %p37 = scmp.eq.s32.totalorder %s15, 1
    %p38 = por %p36, %p37
    %p40 = scmp.ne.s32.totalorder %s23, %s39
    %p41 = scmp.eq.s32.totalorder %s15, 0
    %p42 = por %p40, %p41
    %s44 = sadd.s32 %s43, 1
    %p47 = scmp.eq.s32.totalorder %s9, 1
    %p48 = scmp.ne.s32.totalorder %s43, %s45
    %p49 = scmp.eq.s32.totalorder %s9, 0
    %p50 = por %p48, %p49
    %p51 = scmp.ne.s32.totalorder %s43, %s45
    %p52 = scmp.eq.s32.totalorder %s14, 1
    %p53 = por %p51, %p52
    %p54 = scmp.ne.s32.totalorder %s45, %s46
    %p55 = scmp.eq.s32.totalorder %s14, 0
    %p56 = por %p54, %p55
    %p57 = scmp.ne.s32.totalorder %s45, %s46
    %p58 = scmp.eq.s32.totalorder %s15, 1
    %p59 = por %p57, %p58
    %p61 = scmp.ne.s32.totalorder %s46, %s60
    %p62 = scmp.eq.s32.totalorder %s15, 0
    %p63 = por %p61, %p62
    %s65 = sadd.s32 %s64, 1
    %p68 = scmp.eq.s32.totalorder %s9, 1
    %p69 = scmp.ne.s32.totalorder %s64, %s66
    %p70 = scmp.eq.s32.totalorder %s9, 0
    %p71 = por %p69, %p70
    %p72 = scmp.ne.s32.totalorder %s64, %s66
    %p73 = scmp.eq.s32.totalorder %s14, 1
    %p74 = por %p72, %p73
    %p75 = scmp.ne.s32.totalorder %s66, %s67
    %p76 = scmp.eq.s32.totalorder %s14, 0
    %p77 = por %p75, %p76
    %p78 = scmp.ne.s32.totalorder %s66, %s67
    %p79 = scmp.eq.s32.totalorder %s15, 1
    %p80 = por %p78, %p79
    %p82 = scmp.ne.s32.totalorder %s67, %s81
    %p83 = scmp.eq.s32.totalorder %s15, 0
    %p84 = por %p82, %p83
    %s85 = ssub.s32 %s9, %s16
    %p86 = scmp.eq.s32.totalorder %s85, 0
    %s88 = sadd.s32 %s87, 1
    %s89 = scalar_select %p86, %s87, %s88
    %p92 = pneg %p86
    %p93 = scmp.eq.s32.totalorder %s9, 1
    %p94 = por %p92, %p93
    %p95 = scmp.ne.s32.totalorder %s87, %s90
    %p96 = scmp.eq.s32.totalorder %s9, 0
    %p97 = por %p95, %p96
    %p98 = scmp.ne.s32.totalorder %s87, %s90
    %p99 = scmp.eq.s32.totalorder %s14, 1
    %p100 = por %p98, %p99
    %p101 = scmp.ne.s32.totalorder %s90, %s91
    %p102 = scmp.eq.s32.totalorder %s14, 0
    %p103 = por %p101, %p102
    %p104 = scmp.ne.s32.totalorder %s90, %s91
    %p105 = scmp.eq.s32.totalorder %s15, 1
    %p106 = por %p104, %p105
    %p108 = scmp.ne.s32.totalorder %s91, %s107
    %p109 = scmp.eq.s32.totalorder %s15, 0
    %p110 = por %p108, %p109
    %p111 = scmp.le.s32.totalorder 1, %s9
    %p112 = scmp.lt.s32.totalorder %s9, 3
    %p113 = pnand %p111, %p112
    %p114 = pneg %p113
    // Predicated region
    $region9: #{tpu_custom_call.1} parent=5 // pred_check
      _
    $region10: #{tpu_custom_call.1} parent=5 // pred_check_branch
      %116 = sbr.rel (%p113) target = $region12
    $region11: #{tpu_custom_call.1} parent=5 // pred_region
      %s117 = ssub.s32 %s9, 1
      // Predicated region
      $region13: #{tpu_custom_call.1} parent=11 // pred_check
        %p118 = pneg %p56
      $region14: #{tpu_custom_call.1} parent=11 // pred_check_branch
        %120 = sbr.rel (%p118) target = $region16
      $region15: #{tpu_custom_call.1} parent=11 // pred_region
        _
      $region16: #{tpu_custom_call.1} parent=11 // pred_fallthru
        _
      // Predicated region
      $region17: #{tpu_custom_call.1} parent=11 // pred_check
        %p121 = pneg %p77
      $region18: #{tpu_custom_call.1} parent=11 // pred_check_branch
        %123 = sbr.rel (%p121) target = $region20
      $region19: #{tpu_custom_call.1} parent=11 // pred_region
        _
      $region20: #{tpu_custom_call.1} parent=11 // pred_fallthru
        _
    $region12: #{tpu_custom_call.1} parent=5 // pred_fallthru
      _
    %p124 = scmp.lt.s32.totalorder %s9, 2
    // Predicated region
    $region21: #{tpu_custom_call.1} parent=5 // pred_check
      %p125 = pneg %p124
    $region22: #{tpu_custom_call.1} parent=5 // pred_check_branch
      %127 = sbr.rel (%p125) target = $region24
    $region23: #{tpu_custom_call.1} parent=5 // pred_region
      // Predicated region
      $region25: #{tpu_custom_call.1} parent=23 // pred_check
        %p128 = pneg %p29
      $region26: #{tpu_custom_call.1} parent=23 // pred_check_branch
        %130 = sbr.rel (%p128) target = $region28
      $region27: #{tpu_custom_call.1} parent=23 // pred_region
        %s131 = smul.u32 32, %s9
        %p132 = scmp.lt.s32.totalorder %s131, 63
        %s133 = scalar_select %p132, %s131, 63
        %s134 = smul.addr %s133, 4
        %s135 = scalar_lea.vmem %s0, %s134
        %s136 = smul.u32 32, %s9
      $region28: #{tpu_custom_call.1} parent=23 // pred_fallthru
        _
    $region24: #{tpu_custom_call.1} parent=5 // pred_fallthru
      _
    %p137 = scmp.le.s32.totalorder 1, %s9
    %p138 = scmp.lt.s32.totalorder %s9, 3
    %p139 = pnand %p137, %p138
    %p140 = pneg %p139
    // Predicated region
    $region29: #{tpu_custom_call.1} parent=5 // pred_check
      _
    $region30: #{tpu_custom_call.1} parent=5 // pred_check_branch
      %142 = sbr.rel (%p139) target = $region32
    $region31: #{tpu_custom_call.1} parent=5 // pred_region
      %s143 = ssub.s32 %s9, 1
      %s144 = smul.u32 32, %s14
      %p145 = scmp.lt.s32.totalorder %s144, 63
      %s146 = scalar_select %p145, %s144, 63
      %s147 = smul.addr %s146, 4
      %s148 = scalar_lea.vmem %s0, %s147
      %p149 = pneg %p35
      %p150 = pneg %p32
      %p151 = pneg %p56
      %p152 = pneg %p53
      %p153 = pneg %p77
      %p154 = pneg %p74
      %p155 = pneg %p103
      %p156 = pneg %p100
      %s157 = smul.u32 32, %s14
      %p158 = scmp.lt.s32.totalorder %s157, 63
      %s159 = scalar_select %p158, %s157, 63
      %s160 = smul.addr %s159, 4
      %s161 = scalar_lea.vmem %s3, %s160
      %s162 = smul.u32 32, %s14
      %p163 = scmp.lt.s32.totalorder %s162, 63
      %s164 = scalar_select %p163, %s162, 63
      %s165 = smul.addr %s164, 4
      %s166 = scalar_lea.vmem %s0, %s165
      %s167 = smul.u32 32, %s14
      %s168 = smul.u32 32, %s14
      %p169 = scmp.lt.s32.totalorder %s168, 63
      %s170 = scalar_select %p169, %s168, 63
      %s171 = smul.addr %s170, 4
      %s172 = scalar_lea.vmem %s3, %s171
      %s173 = smul.u32 32, %s14
      %v175 = vld [vmem:[%s166] sm:$0xf]
      %v176 = vld [vmem:[%s166 + $0x4] sm:$0xf]
      %v177 = vld [vmem:[%s166 + $0x8] sm:$0xf]
      %v178 = vld [vmem:[%s166 + $0xc] sm:$0xf]
      %v179 = vld [vmem:[%s166 + $0x10] sm:$0xf]
      %v180 = vld [vmem:[%s166 + $0x14] sm:$0xf]
      %v181 = vld [vmem:[%s166 + $0x18] sm:$0xf]
      %v182 = vld [vmem:[%s166 + $0x1c] sm:$0xf]
      %v183 = vld [vmem:[%s166 + $0x20] sm:$0xf]
      %v184 = vld [vmem:[%s166 + $0x24] sm:$0xf]
      %v185 = vld [vmem:[%s166 + $0x28] sm:$0xf]
      %v186 = vld [vmem:[%s166 + $0x2c] sm:$0xf]
      %v187 = vld [vmem:[%s166 + $0x30] sm:$0xf]
      %v188 = vld [vmem:[%s166 + $0x34] sm:$0xf]
      %v189 = vld [vmem:[%s166 + $0x38] sm:$0xf]
      %v190 = vld [vmem:[%s166 + $0x3c] sm:$0xf]
      %v191 = vld [vmem:[%s166 + $0x40] sm:$0xf]
      %v192 = vld [vmem:[%s166 + $0x44] sm:$0xf]
      %v193 = vld [vmem:[%s166 + $0x48] sm:$0xf]
      %v194 = vld [vmem:[%s166 + $0x4c] sm:$0xf]
      %v195 = vld [vmem:[%s166 + $0x50] sm:$0xf]
      %v196 = vld [vmem:[%s166 + $0x54] sm:$0xf]
      %v197 = vld [vmem:[%s166 + $0x58] sm:$0xf]
      %v198 = vld [vmem:[%s166 + $0x5c] sm:$0xf]
      %v199 = vld [vmem:[%s166 + $0x60] sm:$0xf]
      %v200 = vld [vmem:[%s166 + $0x64] sm:$0xf]
      %v201 = vld [vmem:[%s166 + $0x68] sm:$0xf]
      %v202 = vld [vmem:[%s166 + $0x6c] sm:$0xf]
      %v203 = vld [vmem:[%s166 + $0x70] sm:$0xf]
      %v204 = vld [vmem:[%s166 + $0x74] sm:$0xf]
      %v205 = vld [vmem:[%s166 + $0x78] sm:$0xf]
      %v206 = vld [vmem:[%s166 + $0x7c] sm:$0xf]
      %v207 = vld [vmem:[%s1] sm:$0xf]
      %v208 = vld [vmem:[%s1 + $0x4] sm:$0xf]
      %v209 = vld [vmem:[%s1 + $0x8] sm:$0xf]
      %v210 = vld [vmem:[%s1 + $0xc] sm:$0x3]
      %v211 = vld [vmem:[%s2] sm:$0x1]
      %v213 = vperm.slane %v211, 0
      %v247 = vunpack.c.l.b16 %v175
      %v248 = vunpack.c.l.b16 %v176
      %v249 = vunpack.c.l.b16 %v177
      %v250 = vunpack.c.l.b16 %v178
      %v251 = vunpack.c.l.b16 %v179
      %v252 = vunpack.c.l.b16 %v180
      %v253 = vunpack.c.l.b16 %v181
      %v254 = vunpack.c.l.b16 %v182
      %v255 = vunpack.c.l.b16 %v183
      %v256 = vunpack.c.l.b16 %v184
      %v257 = vunpack.c.l.b16 %v185
      %v258 = vunpack.c.l.b16 %v186
      %v259 = vunpack.c.l.b16 %v187
      %v260 = vunpack.c.l.b16 %v188
      %v261 = vunpack.c.l.b16 %v189
      %v262 = vunpack.c.l.b16 %v190
      %v263 = vunpack.c.l.b16 %v191
      %v264 = vunpack.c.l.b16 %v192
      %v265 = vunpack.c.l.b16 %v193
      %v266 = vunpack.c.l.b16 %v194
      %v267 = vunpack.c.l.b16 %v195
      %v268 = vunpack.c.l.b16 %v196
      %v269 = vunpack.c.l.b16 %v197
      %v270 = vunpack.c.l.b16 %v198
      %v271 = vunpack.c.l.b16 %v199
      %v272 = vunpack.c.l.b16 %v200
      %v273 = vunpack.c.l.b16 %v201
      %v274 = vunpack.c.l.b16 %v202
      %v275 = vunpack.c.l.b16 %v203
      %v276 = vunpack.c.l.b16 %v204
      %v277 = vunpack.c.l.b16 %v205
      %v278 = vunpack.c.l.b16 %v206
      %v279 = vpack.c.b16 %v248, %v247
      %v280 = vpack.c.b16 %v250, %v249
      %v281 = vpack.c.b16 %v252, %v251
      %v282 = vpack.c.b16 %v254, %v253
      %v283 = vpack.c.b16 %v256, %v255
      %v284 = vpack.c.b16 %v258, %v257
      %v285 = vpack.c.b16 %v260, %v259
      %v286 = vpack.c.b16 %v262, %v261
      %v287 = vpack.c.b16 %v264, %v263
      %v288 = vpack.c.b16 %v266, %v265
      %v289 = vpack.c.b16 %v268, %v267
      %v290 = vpack.c.b16 %v270, %v269
      %v291 = vpack.c.b16 %v272, %v271
      %v292 = vpack.c.b16 %v274, %v273
      %v293 = vpack.c.b16 %v276, %v275
      %v294 = vpack.c.b16 %v278, %v277
      %v299 = vunpack.c.l.b16 %v207
      %v300 = vunpack.c.l.b16 %v208
      %v301 = vunpack.c.l.b16 %v209
      %v302 = vunpack.c.l.b16 %v210
      %v303 = vpack.c.b16 %v300, %v299
      %v304 = vpack.c.b16 %v302, %v301
      %vm306 = vcmask 220160
      %v308 = vsel %vm306, %v279, 0
      %v311 = vsel %vm306, %v280, 0
      %v314 = vsel %vm306, %v281, 0
      %v317 = vsel %vm306, %v282, 0
      %v320 = vsel %vm306, %v283, 0
      %v323 = vsel %vm306, %v284, 0
      %v326 = vsel %vm306, %v285, 0
      %v329 = vsel %vm306, %v286, 0
      %v332 = vsel %vm306, %v287, 0
      %v335 = vsel %vm306, %v288, 0
      %v338 = vsel %vm306, %v289, 0
      %v341 = vsel %vm306, %v290, 0
      %v344 = vsel %vm306, %v291, 0
      %v347 = vsel %vm306, %v292, 0
      %v350 = vsel %vm306, %v293, 0
      %v353 = vsel %vm306, %v294, 0
      %vm355 = vcmask 1044480
      %vm356 = vcmask 1045504
      %v357 = vsel %vm355, 4294967295, 65535
      %v358 = vsel %vm356, %v357, 0
      %v360 = vand.u32 %v304, %v358
      %362 = vmatpush.bf16.msra.mxu0 0
      %363 = vmatpush.bf16.msra.mxu0 0
      %364 = vmatpush.bf16.msra.mxu0 0
      %365 = vmatpush.bf16.msra.mxu0 0
      %366 = vmatpush.bf16.msra.mxu0 0
      %367 = vmatpush.bf16.msra.mxu0 0
      %368 = vmatpush.bf16.msra.mxu0 %v360
      %369 = vmatpush.bf16.msra.mxu0 %v303
      %370 = vmatmul.bf16.gmra.mxu0 %v308
      %v371 = vpop.f32.mrf.mxu0
      %v372 = vadd.f32 %v213, %v371
      %v373 = vpop.f32.mrf.mxu0
      %v374 = vadd.f32 %v213, %v373
      %375 = vmatmul.bf16.gmra.mxu0 %v311
      %v376 = vpop.f32.mrf.mxu0
      %v377 = vadd.f32 %v213, %v376
      %v378 = vpop.f32.mrf.mxu0
      %v379 = vadd.f32 %v213, %v378
      %380 = vmatmul.bf16.gmra.mxu0 %v314
      %v381 = vpop.f32.mrf.mxu0
      %v382 = vadd.f32 %v213, %v381
      %v383 = vpop.f32.mrf.mxu0
      %v384 = vadd.f32 %v213, %v383
      %385 = vmatmul.bf16.gmra.mxu0 %v317
      %v386 = vpop.f32.mrf.mxu0
      %v387 = vadd.f32 %v213, %v386
      %v388 = vpop.f32.mrf.mxu0
      %v389 = vadd.f32 %v213, %v388
      %390 = vmatmul.bf16.gmra.mxu0 %v320
      %v391 = vpop.f32.mrf.mxu0
      %v392 = vadd.f32 %v213, %v391
      %v393 = vpop.f32.mrf.mxu0
      %v394 = vadd.f32 %v213, %v393
      %395 = vmatmul.bf16.gmra.mxu0 %v323
      %v396 = vpop.f32.mrf.mxu0
      %v397 = vadd.f32 %v213, %v396
      %v398 = vpop.f32.mrf.mxu0
      %v399 = vadd.f32 %v213, %v398
      %400 = vmatmul.bf16.gmra.mxu0 %v326
      %v401 = vpop.f32.mrf.mxu0
      %v402 = vadd.f32 %v213, %v401
      %v403 = vpop.f32.mrf.mxu0
      %v404 = vadd.f32 %v213, %v403
      %405 = vmatmul.bf16.gmra.mxu0 %v329
      %v406 = vpop.f32.mrf.mxu0
      %v407 = vadd.f32 %v213, %v406
      %v408 = vpop.f32.mrf.mxu0
      %v409 = vadd.f32 %v213, %v408
      %410 = vmatmul.bf16.gmra.mxu0 %v332
      %v411 = vpop.f32.mrf.mxu0
      %v412 = vadd.f32 %v213, %v411
      %v413 = vpop.f32.mrf.mxu0
      %v414 = vadd.f32 %v213, %v413
      %415 = vmatmul.bf16.gmra.mxu0 %v335
      %v416 = vpop.f32.mrf.mxu0
      %v417 = vadd.f32 %v213, %v416
      %v418 = vpop.f32.mrf.mxu0
      %v419 = vadd.f32 %v213, %v418
      %420 = vmatmul.bf16.gmra.mxu0 %v338
      %v421 = vpop.f32.mrf.mxu0
      %v422 = vadd.f32 %v213, %v421
      %v423 = vpop.f32.mrf.mxu0
      %v424 = vadd.f32 %v213, %v423
      %425 = vmatmul.bf16.gmra.mxu0 %v341
      %v426 = vpop.f32.mrf.mxu0
      %v427 = vadd.f32 %v213, %v426
      %v428 = vpop.f32.mrf.mxu0
      %v429 = vadd.f32 %v213, %v428
      %430 = vmatmul.bf16.gmra.mxu0 %v344
      %v431 = vpop.f32.mrf.mxu0
      %v432 = vadd.f32 %v213, %v431
      %v433 = vpop.f32.mrf.mxu0
      %v434 = vadd.f32 %v213, %v433
      %435 = vmatmul.bf16.gmra.mxu0 %v347
      %v436 = vpop.f32.mrf.mxu0
      %v437 = vadd.f32 %v213, %v436
      %v438 = vpop.f32.mrf.mxu0
      %v439 = vadd.f32 %v213, %v438
      %440 = vmatmul.bf16.gmra.mxu0 %v350
      %v441 = vpop.f32.mrf.mxu0
      %v442 = vadd.f32 %v213, %v441
      %v443 = vpop.f32.mrf.mxu0
      %v444 = vadd.f32 %v213, %v443
      %445 = vmatmul.bf16.gmra.mxu0 %v353
      %v446 = vpop.f32.mrf.mxu0
      %v447 = vadd.f32 %v213, %v446
      %v448 = vpop.f32.mrf.mxu0
      %v449 = vadd.f32 %v213, %v448
      %450 = vdwg.mxu0
      %v451 = vxor.u32 %v372, 2147483648
      %v452 = vxor.u32 %v374, 2147483648
      %v453 = vxor.u32 %v377, 2147483648
      %v454 = vxor.u32 %v379, 2147483648
      %v455 = vxor.u32 %v382, 2147483648
      %v456 = vxor.u32 %v384, 2147483648
      %v457 = vxor.u32 %v387, 2147483648
      %v458 = vxor.u32 %v389, 2147483648
      %v459 = vxor.u32 %v392, 2147483648
      %v460 = vxor.u32 %v394, 2147483648
      %v461 = vxor.u32 %v397, 2147483648
      %v462 = vxor.u32 %v399, 2147483648
      %v463 = vxor.u32 %v402, 2147483648
      %v464 = vxor.u32 %v404, 2147483648
      %v465 = vxor.u32 %v407, 2147483648
      %v466 = vxor.u32 %v409, 2147483648
      %v467 = vxor.u32 %v412, 2147483648
      %v468 = vxor.u32 %v414, 2147483648
      %v469 = vxor.u32 %v417, 2147483648
      %v470 = vxor.u32 %v419, 2147483648
      %v471 = vxor.u32 %v422, 2147483648
      %v472 = vxor.u32 %v424, 2147483648
      %v473 = vxor.u32 %v427, 2147483648
      %v474 = vxor.u32 %v429, 2147483648
      %v475 = vxor.u32 %v432, 2147483648
      %v476 = vxor.u32 %v434, 2147483648
      %v477 = vxor.u32 %v437, 2147483648
      %v478 = vxor.u32 %v439, 2147483648
      %v479 = vxor.u32 %v442, 2147483648
      %v480 = vxor.u32 %v444, 2147483648
      %v481 = vxor.u32 %v447, 2147483648
      %v482 = vxor.u32 %v449, 2147483648
      %v483 = vmul.f32 %v451, 1.442695
      %v484 = vpow.pop %v483
      %v485 = vmul.f32 %v452, 1.442695
      %v486 = vpow.pop %v485
      %v487 = vmul.f32 %v453, 1.442695
      %v488 = vpow.pop %v487
      %v489 = vmul.f32 %v454, 1.442695
      %v490 = vpow.pop %v489
      %v491 = vmul.f32 %v455, 1.442695
      %v492 = vpow.pop %v491
      %v493 = vmul.f32 %v456, 1.442695
      %v494 = vpow.pop %v493
      %v495 = vmul.f32 %v457, 1.442695
      %v496 = vpow.pop %v495
      %v497 = vmul.f32 %v458, 1.442695
      %v498 = vpow.pop %v497
      %v499 = vmul.f32 %v459, 1.442695
      %v500 = vpow.pop %v499
      %v501 = vmul.f32 %v460, 1.442695
      %v502 = vpow.pop %v501
      %v503 = vmul.f32 %v461, 1.442695
      %v504 = vpow.pop %v503
      %v505 = vmul.f32 %v462, 1.442695
      %v506 = vpow.pop %v505
      %v507 = vmul.f32 %v463, 1.442695
      %v508 = vpow.pop %v507
      %v509 = vmul.f32 %v464, 1.442695
      %v510 = vpow.pop %v509
      %v511 = vmul.f32 %v465, 1.442695
      %v512 = vpow.pop %v511
      %v513 = vmul.f32 %v466, 1.442695
      %v514 = vpow.pop %v513
      %v515 = vmul.f32 %v467, 1.442695
      %v516 = vpow.pop %v515
      %v517 = vmul.f32 %v468, 1.442695
      %v518 = vpow.pop %v517
      %v519 = vmul.f32 %v469, 1.442695
      %v520 = vpow.pop %v519
      %v521 = vmul.f32 %v470, 1.442695
      %v522 = vpow.pop %v521
      %v523 = vmul.f32 %v471, 1.442695
      %v524 = vpow.pop %v523
      %v525 = vmul.f32 %v472, 1.442695
      %v526 = vpow.pop %v525
      %v527 = vmul.f32 %v473, 1.442695
      %v528 = vpow.pop %v527
      %v529 = vmul.f32 %v474, 1.442695
      %v530 = vpow.pop %v529
      %v531 = vmul.f32 %v475, 1.442695
      %v532 = vpow.pop %v531
      %v533 = vmul.f32 %v476, 1.442695
      %v534 = vpow.pop %v533
      %v535 = vmul.f32 %v477, 1.442695
      %v536 = vpow.pop %v535
      %v537 = vmul.f32 %v478, 1.442695
      %v538 = vpow.pop %v537
      %v539 = vmul.f32 %v479, 1.442695
      %v540 = vpow.pop %v539
      %v541 = vmul.f32 %v480, 1.442695
      %v542 = vpow.pop %v541
      %v543 = vmul.f32 %v481, 1.442695
      %v544 = vpow.pop %v543
      %v545 = vmul.f32 %v482, 1.442695
      %v546 = vpow.pop %v545
      %v547 = vadd.f32 %v484, 1.0
      %v548 = vadd.f32 %v486, 1.0
      %v549 = vadd.f32 %v488, 1.0
      %v550 = vadd.f32 %v490, 1.0
      %v551 = vadd.f32 %v492, 1.0
      %v552 = vadd.f32 %v494, 1.0
      %v553 = vadd.f32 %v496, 1.0
      %v554 = vadd.f32 %v498, 1.0
      %v555 = vadd.f32 %v500, 1.0
      %v556 = vadd.f32 %v502, 1.0
      %v557 = vadd.f32 %v504, 1.0
      %v558 = vadd.f32 %v506, 1.0
      %v559 = vadd.f32 %v508, 1.0
      %v560 = vadd.f32 %v510, 1.0
      %v561 = vadd.f32 %v512, 1.0
      %v562 = vadd.f32 %v514, 1.0
      %v563 = vadd.f32 %v516, 1.0
      %v564 = vadd.f32 %v518, 1.0
      %v565 = vadd.f32 %v520, 1.0
      %v566 = vadd.f32 %v522, 1.0
      %v567 = vadd.f32 %v524, 1.0
      %v568 = vadd.f32 %v526, 1.0
      %v569 = vadd.f32 %v528, 1.0
      %v570 = vadd.f32 %v530, 1.0
      %v571 = vadd.f32 %v532, 1.0
      %v572 = vadd.f32 %v534, 1.0
      %v573 = vadd.f32 %v536, 1.0
      %v574 = vadd.f32 %v538, 1.0
      %v575 = vadd.f32 %v540, 1.0
      %v576 = vadd.f32 %v542, 1.0
      %v577 = vadd.f32 %v544, 1.0
      %v578 = vadd.f32 %v546, 1.0
      %v579 = vrcp.pop %v547
      %v580 = vmul.f32 %v547, %v579
      %v581 = vsub.f32 1.0, %v580
      %v582 = vmul.f32 %v579, %v581
      %v583 = vadd.f32 %v579, %v582
      %vm584 = vweird.f32 %v547
      %vm585 = vweird.f32 %v579
      %vm586 = vmor %vm584, %vm585
      %v587 = vsel %vm586, %v579, %v583
      %v588 = vand.u32 2147483647, %v547
      %vm589 = vcmp.eq.f32.partialorder %v588, 8.507059e+37
      %v590 = vand.u32 %v547, 2147483648
      %v591 = vor.u32 1.1754944e-38, %v590
      %v592 = vsel %vm589, %v591, %v587
      %v593 = vmul.f32 1.0, %v592
      %v594 = vrcp.pop %v548
      %v595 = vmul.f32 %v548, %v594
      %v596 = vsub.f32 1.0, %v595
      %v597 = vmul.f32 %v594, %v596
      %v598 = vadd.f32 %v594, %v597
      %vm599 = vweird.f32 %v548
      %vm600 = vweird.f32 %v594
      %vm601 = vmor %vm599, %vm600
      %v602 = vsel %vm601, %v594, %v598
      %v603 = vand.u32 2147483647, %v548
      %vm604 = vcmp.eq.f32.partialorder %v603, 8.507059e+37
      %v605 = vand.u32 %v548, 2147483648
      %v606 = vor.u32 1.1754944e-38, %v605
      %v607 = vsel %vm604, %v606, %v602
      %v608 = vmul.f32 1.0, %v607
      %v609 = vrcp.pop %v549
      %v610 = vmul.f32 %v549, %v609
      %v611 = vsub.f32 1.0, %v610
      %v612 = vmul.f32 %v609, %v611
      %v613 = vadd.f32 %v609, %v612
      %vm614 = vweird.f32 %v549
      %vm615 = vweird.f32 %v609
      %vm616 = vmor %vm614, %vm615
      %v617 = vsel %vm616, %v609, %v613
      %v618 = vand.u32 2147483647, %v549
      %vm619 = vcmp.eq.f32.partialorder %v618, 8.507059e+37
      %v620 = vand.u32 %v549, 2147483648
      %v621 = vor.u32 1.1754944e-38, %v620
      %v622 = vsel %vm619, %v621, %v617
      %v623 = vmul.f32 1.0, %v622
      %v624 = vrcp.pop %v550
      %v625 = vmul.f32 %v550, %v624
      %v626 = vsub.f32 1.0, %v625
      %v627 = vmul.f32 %v624, %v626
      %v628 = vadd.f32 %v624, %v627
      %vm629 = vweird.f32 %v550
      %vm630 = vweird.f32 %v624
      %vm631 = vmor %vm629, %vm630
      %v632 = vsel %vm631, %v624, %v628
      %v633 = vand.u32 2147483647, %v550
      %vm634 = vcmp.eq.f32.partialorder %v633, 8.507059e+37
      %v635 = vand.u32 %v550, 2147483648
      %v636 = vor.u32 1.1754944e-38, %v635
      %v637 = vsel %vm634, %v636, %v632
      %v638 = vmul.f32 1.0, %v637
      %v639 = vrcp.pop %v551
      %v640 = vmul.f32 %v551, %v639
      %v641 = vsub.f32 1.0, %v640
      %v642 = vmul.f32 %v639, %v641
      %v643 = vadd.f32 %v639, %v642
      %vm644 = vweird.f32 %v551
      %vm645 = vweird.f32 %v639
      %vm646 = vmor %vm644, %vm645
      %v647 = vsel %vm646, %v639, %v643
      %v648 = vand.u32 2147483647, %v551
      %vm649 = vcmp.eq.f32.partialorder %v648, 8.507059e+37
      %v650 = vand.u32 %v551, 2147483648
      %v651 = vor.u32 1.1754944e-38, %v650
      %v652 = vsel %vm649, %v651, %v647
      %v653 = vmul.f32 1.0, %v652
      %v654 = vrcp.pop %v552
      %v655 = vmul.f32 %v552, %v654
      %v656 = vsub.f32 1.0, %v655
      %v657 = vmul.f32 %v654, %v656
      %v658 = vadd.f32 %v654, %v657
      %vm659 = vweird.f32 %v552
      %vm660 = vweird.f32 %v654
      %vm661 = vmor %vm659, %vm660
      %v662 = vsel %vm661, %v654, %v658
      %v663 = vand.u32 2147483647, %v552
      %vm664 = vcmp.eq.f32.partialorder %v663, 8.507059e+37
      %v665 = vand.u32 %v552, 2147483648
      %v666 = vor.u32 1.1754944e-38, %v665
      %v667 = vsel %vm664, %v666, %v662
      %v668 = vmul.f32 1.0, %v667
      %v669 = vrcp.pop %v553
      %v670 = vmul.f32 %v553, %v669
      %v671 = vsub.f32 1.0, %v670
      %v672 = vmul.f32 %v669, %v671
      %v673 = vadd.f32 %v669, %v672
      %vm674 = vweird.f32 %v553
      %vm675 = vweird.f32 %v669
      %vm676 = vmor %vm674, %vm675
      %v677 = vsel %vm676, %v669, %v673
      %v678 = vand.u32 2147483647, %v553
      %vm679 = vcmp.eq.f32.partialorder %v678, 8.507059e+37
      %v680 = vand.u32 %v553, 2147483648
      %v681 = vor.u32 1.1754944e-38, %v680
      %v682 = vsel %vm679, %v681, %v677
      %v683 = vmul.f32 1.0, %v682
      %v684 = vrcp.pop %v554
      %v685 = vmul.f32 %v554, %v684
      %v686 = vsub.f32 1.0, %v685
      %v687 = vmul.f32 %v684, %v686
      %v688 = vadd.f32 %v684, %v687
      %vm689 = vweird.f32 %v554
      %vm690 = vweird.f32 %v684
      %vm691 = vmor %vm689, %vm690
      %v692 = vsel %vm691, %v684, %v688
      %v693 = vand.u32 2147483647, %v554
      %vm694 = vcmp.eq.f32.partialorder %v693, 8.507059e+37
      %v695 = vand.u32 %v554, 2147483648
      %v696 = vor.u32 1.1754944e-38, %v695
      %v697 = vsel %vm694, %v696, %v692
      %v698 = vmul.f32 1.0, %v697
      %v699 = vrcp.pop %v555
      %v700 = vmul.f32 %v555, %v699
      %v701 = vsub.f32 1.0, %v700
      %v702 = vmul.f32 %v699, %v701
      %v703 = vadd.f32 %v699, %v702
      %vm704 = vweird.f32 %v555
      %vm705 = vweird.f32 %v699
      %vm706 = vmor %vm704, %vm705
      %v707 = vsel %vm706, %v699, %v703
      %v708 = vand.u32 2147483647, %v555
      %vm709 = vcmp.eq.f32.partialorder %v708, 8.507059e+37
      %v710 = vand.u32 %v555, 2147483648
      %v711 = vor.u32 1.1754944e-38, %v710
      %v712 = vsel %vm709, %v711, %v707
      %v713 = vmul.f32 1.0, %v712
      %v714 = vrcp.pop %v556
      %v715 = vmul.f32 %v556, %v714
      %v716 = vsub.f32 1.0, %v715
      %v717 = vmul.f32 %v714, %v716
      %v718 = vadd.f32 %v714, %v717
      %vm719 = vweird.f32 %v556
      %vm720 = vweird.f32 %v714
      %vm721 = vmor %vm719, %vm720
      %v722 = vsel %vm721, %v714, %v718
      %v723 = vand.u32 2147483647, %v556
      %vm724 = vcmp.eq.f32.partialorder %v723, 8.507059e+37
      %v725 = vand.u32 %v556, 2147483648
      %v726 = vor.u32 1.1754944e-38, %v725
      %v727 = vsel %vm724, %v726, %v722
      %v728 = vmul.f32 1.0, %v727
      %v729 = vrcp.pop %v557
      %v730 = vmul.f32 %v557, %v729
      %v731 = vsub.f32 1.0, %v730
      %v732 = vmul.f32 %v729, %v731
      %v733 = vadd.f32 %v729, %v732
      %vm734 = vweird.f32 %v557
      %vm735 = vweird.f32 %v729
      %vm736 = vmor %vm734, %vm735
      %v737 = vsel %vm736, %v729, %v733
      %v738 = vand.u32 2147483647, %v557
      %vm739 = vcmp.eq.f32.partialorder %v738, 8.507059e+37
      %v740 = vand.u32 %v557, 2147483648
      %v741 = vor.u32 1.1754944e-38, %v740
      %v742 = vsel %vm739, %v741, %v737
      %v743 = vmul.f32 1.0, %v742
      %v744 = vrcp.pop %v558
      %v745 = vmul.f32 %v558, %v744
      %v746 = vsub.f32 1.0, %v745
      %v747 = vmul.f32 %v744, %v746
      %v748 = vadd.f32 %v744, %v747
      %vm749 = vweird.f32 %v558
      %vm750 = vweird.f32 %v744
      %vm751 = vmor %vm749, %vm750
      %v752 = vsel %vm751, %v744, %v748
      %v753 = vand.u32 2147483647, %v558
      %vm754 = vcmp.eq.f32.partialorder %v753, 8.507059e+37
      %v755 = vand.u32 %v558, 2147483648
      %v756 = vor.u32 1.1754944e-38, %v755
      %v757 = vsel %vm754, %v756, %v752
      %v758 = vmul.f32 1.0, %v757
      %v759 = vrcp.pop %v559
      %v760 = vmul.f32 %v559, %v759
      %v761 = vsub.f32 1.0, %v760
      %v762 = vmul.f32 %v759, %v761
      %v763 = vadd.f32 %v759, %v762
      %vm764 = vweird.f32 %v559
      %vm765 = vweird.f32 %v759
      %vm766 = vmor %vm764, %vm765
      %v767 = vsel %vm766, %v759, %v763
      %v768 = vand.u32 2147483647, %v559
      %vm769 = vcmp.eq.f32.partialorder %v768, 8.507059e+37
      %v770 = vand.u32 %v559, 2147483648
      %v771 = vor.u32 1.1754944e-38, %v770
      %v772 = vsel %vm769, %v771, %v767
      %v773 = vmul.f32 1.0, %v772
      %v774 = vrcp.pop %v560
      %v775 = vmul.f32 %v560, %v774
      %v776 = vsub.f32 1.0, %v775
      %v777 = vmul.f32 %v774, %v776
      %v778 = vadd.f32 %v774, %v777
      %vm779 = vweird.f32 %v560
      %vm780 = vweird.f32 %v774
      %vm781 = vmor %vm779, %vm780
      %v782 = vsel %vm781, %v774, %v778
      %v783 = vand.u32 2147483647, %v560
      %vm784 = vcmp.eq.f32.partialorder %v783, 8.507059e+37
      %v785 = vand.u32 %v560, 2147483648
      %v786 = vor.u32 1.1754944e-38, %v785
      %v787 = vsel %vm784, %v786, %v782
      %v788 = vmul.f32 1.0, %v787
      %v789 = vrcp.pop %v561
      %v790 = vmul.f32 %v561, %v789
      %v791 = vsub.f32 1.0, %v790
      %v792 = vmul.f32 %v789, %v791
      %v793 = vadd.f32 %v789, %v792
      %vm794 = vweird.f32 %v561
      %vm795 = vweird.f32 %v789
      %vm796 = vmor %vm794, %vm795
      %v797 = vsel %vm796, %v789, %v793
      %v798 = vand.u32 2147483647, %v561
      %vm799 = vcmp.eq.f32.partialorder %v798, 8.507059e+37
      %v800 = vand.u32 %v561, 2147483648
      %v801 = vor.u32 1.1754944e-38, %v800
      %v802 = vsel %vm799, %v801, %v797
      %v803 = vmul.f32 1.0, %v802
      %v804 = vrcp.pop %v562
      %v805 = vmul.f32 %v562, %v804
      %v806 = vsub.f32 1.0, %v805
      %v807 = vmul.f32 %v804, %v806
      %v808 = vadd.f32 %v804, %v807
      %vm809 = vweird.f32 %v562
      %vm810 = vweird.f32 %v804
      %vm811 = vmor %vm809, %vm810
      %v812 = vsel %vm811, %v804, %v808
      %v813 = vand.u32 2147483647, %v562
      %vm814 = vcmp.eq.f32.partialorder %v813, 8.507059e+37
      %v815 = vand.u32 %v562, 2147483648
      %v816 = vor.u32 1.1754944e-38, %v815
      %v817 = vsel %vm814, %v816, %v812
      %v818 = vmul.f32 1.0, %v817
      %v819 = vrcp.pop %v563
      %v820 = vmul.f32 %v563, %v819
      %v821 = vsub.f32 1.0, %v820
      %v822 = vmul.f32 %v819, %v821
      %v823 = vadd.f32 %v819, %v822
      %vm824 = vweird.f32 %v563
      %vm825 = vweird.f32 %v819
      %vm826 = vmor %vm824, %vm825
      %v827 = vsel %vm826, %v819, %v823
      %v828 = vand.u32 2147483647, %v563
      %vm829 = vcmp.eq.f32.partialorder %v828, 8.507059e+37
      %v830 = vand.u32 %v563, 2147483648
      %v831 = vor.u32 1.1754944e-38, %v830
      %v832 = vsel %vm829, %v831, %v827
      %v833 = vmul.f32 1.0, %v832
      %v834 = vrcp.pop %v564
      %v835 = vmul.f32 %v564, %v834
      %v836 = vsub.f32 1.0, %v835
      %v837 = vmul.f32 %v834, %v836
      %v838 = vadd.f32 %v834, %v837
      %vm839 = vweird.f32 %v564
      %vm840 = vweird.f32 %v834
      %vm841 = vmor %vm839, %vm840
      %v842 = vsel %vm841, %v834, %v838
      %v843 = vand.u32 2147483647, %v564
      %vm844 = vcmp.eq.f32.partialorder %v843, 8.507059e+37
      %v845 = vand.u32 %v564, 2147483648
      %v846 = vor.u32 1.1754944e-38, %v845
      %v847 = vsel %vm844, %v846, %v842
      %v848 = vmul.f32 1.0, %v847
      %v849 = vrcp.pop %v565
      %v850 = vmul.f32 %v565, %v849
      %v851 = vsub.f32 1.0, %v850
      %v852 = vmul.f32 %v849, %v851
      %v853 = vadd.f32 %v849, %v852
      %vm854 = vweird.f32 %v565
      %vm855 = vweird.f32 %v849
      %vm856 = vmor %vm854, %vm855
      %v857 = vsel %vm856, %v849, %v853
      %v858 = vand.u32 2147483647, %v565
      %vm859 = vcmp.eq.f32.partialorder %v858, 8.507059e+37
      %v860 = vand.u32 %v565, 2147483648
      %v861 = vor.u32 1.1754944e-38, %v860
      %v862 = vsel %vm859, %v861, %v857
      %v863 = vmul.f32 1.0, %v862
      %v864 = vrcp.pop %v566
      %v865 = vmul.f32 %v566, %v864
      %v866 = vsub.f32 1.0, %v865
      %v867 = vmul.f32 %v864, %v866
      %v868 = vadd.f32 %v864, %v867
      %vm869 = vweird.f32 %v566
      %vm870 = vweird.f32 %v864
      %vm871 = vmor %vm869, %vm870
      %v872 = vsel %vm871, %v864, %v868
      %v873 = vand.u32 2147483647, %v566
      %vm874 = vcmp.eq.f32.partialorder %v873, 8.507059e+37
      %v875 = vand.u32 %v566, 2147483648
      %v876 = vor.u32 1.1754944e-38, %v875
      %v877 = vsel %vm874, %v876, %v872
      %v878 = vmul.f32 1.0, %v877
      %v879 = vrcp.pop %v567
      %v880 = vmul.f32 %v567, %v879
      %v881 = vsub.f32 1.0, %v880
      %v882 = vmul.f32 %v879, %v881
      %v883 = vadd.f32 %v879, %v882
      %vm884 = vweird.f32 %v567
      %vm885 = vweird.f32 %v879
      %vm886 = vmor %vm884, %vm885
      %v887 = vsel %vm886, %v879, %v883
      %v888 = vand.u32 2147483647, %v567
      %vm889 = vcmp.eq.f32.partialorder %v888, 8.507059e+37
      %v890 = vand.u32 %v567, 2147483648
      %v891 = vor.u32 1.1754944e-38, %v890
      %v892 = vsel %vm889, %v891, %v887
      %v893 = vmul.f32 1.0, %v892
      %v894 = vrcp.pop %v568
      %v895 = vmul.f32 %v568, %v894
      %v896 = vsub.f32 1.0, %v895
      %v897 = vmul.f32 %v894, %v896
      %v898 = vadd.f32 %v894, %v897
      %vm899 = vweird.f32 %v568
      %vm900 = vweird.f32 %v894
      %vm901 = vmor %vm899, %vm900
      %v902 = vsel %vm901, %v894, %v898
      %v903 = vand.u32 2147483647, %v568
      %vm904 = vcmp.eq.f32.partialorder %v903, 8.507059e+37
      %v905 = vand.u32 %v568, 2147483648
      %v906 = vor.u32 1.1754944e-38, %v905
      %v907 = vsel %vm904, %v906, %v902
      %v908 = vmul.f32 1.0, %v907
      %v909 = vrcp.pop %v569
      %v910 = vmul.f32 %v569, %v909
      %v911 = vsub.f32 1.0, %v910
      %v912 = vmul.f32 %v909, %v911
      %v913 = vadd.f32 %v909, %v912
      %vm914 = vweird.f32 %v569
      %vm915 = vweird.f32 %v909
      %vm916 = vmor %vm914, %vm915
      %v917 = vsel %vm916, %v909, %v913
      %v918 = vand.u32 2147483647, %v569
      %vm919 = vcmp.eq.f32.partialorder %v918, 8.507059e+37
      %v920 = vand.u32 %v569, 2147483648
      %v921 = vor.u32 1.1754944e-38, %v920
      %v922 = vsel %vm919, %v921, %v917
      %v923 = vmul.f32 1.0, %v922
      %v924 = vrcp.pop %v570
      %v925 = vmul.f32 %v570, %v924
      %v926 = vsub.f32 1.0, %v925
      %v927 = vmul.f32 %v924, %v926
      %v928 = vadd.f32 %v924, %v927
      %vm929 = vweird.f32 %v570
      %vm930 = vweird.f32 %v924
      %vm931 = vmor %vm929, %vm930
      %v932 = vsel %vm931, %v924, %v928
      %v933 = vand.u32 2147483647, %v570
      %vm934 = vcmp.eq.f32.partialorder %v933, 8.507059e+37
      %v935 = vand.u32 %v570, 2147483648
      %v936 = vor.u32 1.1754944e-38, %v935
      %v937 = vsel %vm934, %v936, %v932
      %v938 = vmul.f32 1.0, %v937
      %v939 = vrcp.pop %v571
      %v940 = vmul.f32 %v571, %v939
      %v941 = vsub.f32 1.0, %v940
      %v942 = vmul.f32 %v939, %v941
      %v943 = vadd.f32 %v939, %v942
      %vm944 = vweird.f32 %v571
      %vm945 = vweird.f32 %v939
      %vm946 = vmor %vm944, %vm945
      %v947 = vsel %vm946, %v939, %v943
      %v948 = vand.u32 2147483647, %v571
      %vm949 = vcmp.eq.f32.partialorder %v948, 8.507059e+37
      %v950 = vand.u32 %v571, 2147483648
      %v951 = vor.u32 1.1754944e-38, %v950
      %v952 = vsel %vm949, %v951, %v947
      %v953 = vmul.f32 1.0, %v952
      %v954 = vrcp.pop %v572
      %v955 = vmul.f32 %v572, %v954
      %v956 = vsub.f32 1.0, %v955
      %v957 = vmul.f32 %v954, %v956
      %v958 = vadd.f32 %v954, %v957
      %vm959 = vweird.f32 %v572
      %vm960 = vweird.f32 %v954
      %vm961 = vmor %vm959, %vm960
      %v962 = vsel %vm961, %v954, %v958
      %v963 = vand.u32 2147483647, %v572
      %vm964 = vcmp.eq.f32.partialorder %v963, 8.507059e+37
      %v965 = vand.u32 %v572, 2147483648
      %v966 = vor.u32 1.1754944e-38, %v965
      %v967 = vsel %vm964, %v966, %v962
      %v968 = vmul.f32 1.0, %v967
      %v969 = vrcp.pop %v573
      %v970 = vmul.f32 %v573, %v969
      %v971 = vsub.f32 1.0, %v970
      %v972 = vmul.f32 %v969, %v971
      %v973 = vadd.f32 %v969, %v972
      %vm974 = vweird.f32 %v573
      %vm975 = vweird.f32 %v969
      %vm976 = vmor %vm974, %vm975
      %v977 = vsel %vm976, %v969, %v973
      %v978 = vand.u32 2147483647, %v573
      %vm979 = vcmp.eq.f32.partialorder %v978, 8.507059e+37
      %v980 = vand.u32 %v573, 2147483648
      %v981 = vor.u32 1.1754944e-38, %v980
      %v982 = vsel %vm979, %v981, %v977
      %v983 = vmul.f32 1.0, %v982
      %v984 = vrcp.pop %v574
      %v985 = vmul.f32 %v574, %v984
      %v986 = vsub.f32 1.0, %v985
      %v987 = vmul.f32 %v984, %v986
      %v988 = vadd.f32 %v984, %v987
      %vm989 = vweird.f32 %v574
      %vm990 = vweird.f32 %v984
      %vm991 = vmor %vm989, %vm990
      %v992 = vsel %vm991, %v984, %v988
      %v993 = vand.u32 2147483647, %v574
      %vm994 = vcmp.eq.f32.partialorder %v993, 8.507059e+37
      %v995 = vand.u32 %v574, 2147483648
      %v996 = vor.u32 1.1754944e-38, %v995
      %v997 = vsel %vm994, %v996, %v992
      %v998 = vmul.f32 1.0, %v997
      %v999 = vrcp.pop %v575
      %v1000 = vmul.f32 %v575, %v999
      %v1001 = vsub.f32 1.0, %v1000
      %v1002 = vmul.f32 %v999, %v1001
      %v1003 = vadd.f32 %v999, %v1002
      %vm1004 = vweird.f32 %v575
      %vm1005 = vweird.f32 %v999
      %vm1006 = vmor %vm1004, %vm1005
      %v1007 = vsel %vm1006, %v999, %v1003
      %v1008 = vand.u32 2147483647, %v575
      %vm1009 = vcmp.eq.f32.partialorder %v1008, 8.507059e+37
      %v1010 = vand.u32 %v575, 2147483648
      %v1011 = vor.u32 1.1754944e-38, %v1010
      %v1012 = vsel %vm1009, %v1011, %v1007
      %v1013 = vmul.f32 1.0, %v1012
      %v1014 = vrcp.pop %v576
      %v1015 = vmul.f32 %v576, %v1014
      %v1016 = vsub.f32 1.0, %v1015
      %v1017 = vmul.f32 %v1014, %v1016
      %v1018 = vadd.f32 %v1014, %v1017
      %vm1019 = vweird.f32 %v576
      %vm1020 = vweird.f32 %v1014
      %vm1021 = vmor %vm1019, %vm1020
      %v1022 = vsel %vm1021, %v1014, %v1018
      %v1023 = vand.u32 2147483647, %v576
      %vm1024 = vcmp.eq.f32.partialorder %v1023, 8.507059e+37
      %v1025 = vand.u32 %v576, 2147483648
      %v1026 = vor.u32 1.1754944e-38, %v1025
      %v1027 = vsel %vm1024, %v1026, %v1022
      %v1028 = vmul.f32 1.0, %v1027
      %v1029 = vrcp.pop %v577
      %v1030 = vmul.f32 %v577, %v1029
      %v1031 = vsub.f32 1.0, %v1030
      %v1032 = vmul.f32 %v1029, %v1031
      %v1033 = vadd.f32 %v1029, %v1032
      %vm1034 = vweird.f32 %v577
      %vm1035 = vweird.f32 %v1029
      %vm1036 = vmor %vm1034, %vm1035
      %v1037 = vsel %vm1036, %v1029, %v1033
      %v1038 = vand.u32 2147483647, %v577
      %vm1039 = vcmp.eq.f32.partialorder %v1038, 8.507059e+37
      %v1040 = vand.u32 %v577, 2147483648
      %v1041 = vor.u32 1.1754944e-38, %v1040
      %v1042 = vsel %vm1039, %v1041, %v1037
      %v1043 = vmul.f32 1.0, %v1042
      %v1044 = vrcp.pop %v578
      %v1045 = vmul.f32 %v578, %v1044
      %v1046 = vsub.f32 1.0, %v1045
      %v1047 = vmul.f32 %v1044, %v1046
      %v1048 = vadd.f32 %v1044, %v1047
      %vm1049 = vweird.f32 %v578
      %vm1050 = vweird.f32 %v1044
      %vm1051 = vmor %vm1049, %vm1050
      %v1052 = vsel %vm1051, %v1044, %v1048
      %v1053 = vand.u32 2147483647, %v578
      %vm1054 = vcmp.eq.f32.partialorder %v1053, 8.507059e+37
      %v1055 = vand.u32 %v578, 2147483648
      %v1056 = vor.u32 1.1754944e-38, %v1055
      %v1057 = vsel %vm1054, %v1056, %v1052
      %v1058 = vmul.f32 1.0, %v1057
      %v1059 = vmul.f32 %v372, %v593
      %v1060 = vmul.f32 %v374, %v608
      %v1061 = vmul.f32 %v377, %v623
      %v1062 = vmul.f32 %v379, %v638
      %v1063 = vmul.f32 %v382, %v653
      %v1064 = vmul.f32 %v384, %v668
      %v1065 = vmul.f32 %v387, %v683
      %v1066 = vmul.f32 %v389, %v698
      %v1067 = vmul.f32 %v392, %v713
      %v1068 = vmul.f32 %v394, %v728
      %v1069 = vmul.f32 %v397, %v743
      %v1070 = vmul.f32 %v399, %v758
      %v1071 = vmul.f32 %v402, %v773
      %v1072 = vmul.f32 %v404, %v788
      %v1073 = vmul.f32 %v407, %v803
      %v1074 = vmul.f32 %v409, %v818
      %v1075 = vmul.f32 %v412, %v833
      %v1076 = vmul.f32 %v414, %v848
      %v1077 = vmul.f32 %v417, %v863
      %v1078 = vmul.f32 %v419, %v878
      %v1079 = vmul.f32 %v422, %v893
      %v1080 = vmul.f32 %v424, %v908
      %v1081 = vmul.f32 %v427, %v923
      %v1082 = vmul.f32 %v429, %v938
      %v1083 = vmul.f32 %v432, %v953
      %v1084 = vmul.f32 %v434, %v968
      %v1085 = vmul.f32 %v437, %v983
      %v1086 = vmul.f32 %v439, %v998
      %v1087 = vmul.f32 %v442, %v1013
      %v1088 = vmul.f32 %v444, %v1028
      %v1089 = vmul.f32 %v447, %v1043
      %v1090 = vmul.f32 %v449, %v1058
      %v1091 = vpack.c.bf16 %v1059, %v1059
      %v1092 = vpack.c.bf16 %v1060, %v1060
      %v1093 = vpack.c.bf16 %v1061, %v1061
      %v1094 = vpack.c.bf16 %v1062, %v1062
      %v1095 = vpack.c.bf16 %v1063, %v1063
      %v1096 = vpack.c.bf16 %v1064, %v1064
      %v1097 = vpack.c.bf16 %v1065, %v1065
      %v1098 = vpack.c.bf16 %v1066, %v1066
      %v1099 = vpack.c.bf16 %v1067, %v1067
      %v1100 = vpack.c.bf16 %v1068, %v1068
      %v1101 = vpack.c.bf16 %v1069, %v1069
      %v1102 = vpack.c.bf16 %v1070, %v1070
      %v1103 = vpack.c.bf16 %v1071, %v1071
      %v1104 = vpack.c.bf16 %v1072, %v1072
      %v1105 = vpack.c.bf16 %v1073, %v1073
      %v1106 = vpack.c.bf16 %v1074, %v1074
      %v1107 = vpack.c.bf16 %v1075, %v1075
      %v1108 = vpack.c.bf16 %v1076, %v1076
      %v1109 = vpack.c.bf16 %v1077, %v1077
      %v1110 = vpack.c.bf16 %v1078, %v1078
      %v1111 = vpack.c.bf16 %v1079, %v1079
      %v1112 = vpack.c.bf16 %v1080, %v1080
      %v1113 = vpack.c.bf16 %v1081, %v1081
      %v1114 = vpack.c.bf16 %v1082, %v1082
      %v1115 = vpack.c.bf16 %v1083, %v1083
      %v1116 = vpack.c.bf16 %v1084, %v1084
      %v1117 = vpack.c.bf16 %v1085, %v1085
      %v1118 = vpack.c.bf16 %v1086, %v1086
      %v1119 = vpack.c.bf16 %v1087, %v1087
      %v1120 = vpack.c.bf16 %v1088, %v1088
      %v1121 = vpack.c.bf16 %v1089, %v1089
      %v1122 = vpack.c.bf16 %v1090, %v1090
      %vm1123 = vcmask 125952
      %1124 = vst.msk [vmem:[%s172] sm:$0xf] %vm1123, %v1091
      %1125 = vst.msk [vmem:[%s172 + $0x4] sm:$0xf] %vm1123, %v1092
      %1126 = vst.msk [vmem:[%s172 + $0x8] sm:$0xf] %vm1123, %v1093
      %1127 = vst.msk [vmem:[%s172 + $0xc] sm:$0xf] %vm1123, %v1094
      %1128 = vst.msk [vmem:[%s172 + $0x10] sm:$0xf] %vm1123, %v1095
      %1129 = vst.msk [vmem:[%s172 + $0x14] sm:$0xf] %vm1123, %v1096
      %1130 = vst.msk [vmem:[%s172 + $0x18] sm:$0xf] %vm1123, %v1097
      %1131 = vst.msk [vmem:[%s172 + $0x1c] sm:$0xf] %vm1123, %v1098
      %1132 = vst.msk [vmem:[%s172 + $0x20] sm:$0xf] %vm1123, %v1099
      %1133 = vst.msk [vmem:[%s172 + $0x24] sm:$0xf] %vm1123, %v1100
      %1134 = vst.msk [vmem:[%s172 + $0x28] sm:$0xf] %vm1123, %v1101
      %1135 = vst.msk [vmem:[%s172 + $0x2c] sm:$0xf] %vm1123, %v1102
      %1136 = vst.msk [vmem:[%s172 + $0x30] sm:$0xf] %vm1123, %v1103
      %1137 = vst.msk [vmem:[%s172 + $0x34] sm:$0xf] %vm1123, %v1104
      %1138 = vst.msk [vmem:[%s172 + $0x38] sm:$0xf] %vm1123, %v1105
      %1139 = vst.msk [vmem:[%s172 + $0x3c] sm:$0xf] %vm1123, %v1106
      %1140 = vst.msk [vmem:[%s172 + $0x40] sm:$0xf] %vm1123, %v1107
      %1141 = vst.msk [vmem:[%s172 + $0x44] sm:$0xf] %vm1123, %v1108
      %1142 = vst.msk [vmem:[%s172 + $0x48] sm:$0xf] %vm1123, %v1109
      %1143 = vst.msk [vmem:[%s172 + $0x4c] sm:$0xf] %vm1123, %v1110
      %1144 = vst.msk [vmem:[%s172 + $0x50] sm:$0xf] %vm1123, %v1111
      %1145 = vst.msk [vmem:[%s172 + $0x54] sm:$0xf] %vm1123, %v1112
      %1146 = vst.msk [vmem:[%s172 + $0x58] sm:$0xf] %vm1123, %v1113
      %1147 = vst.msk [vmem:[%s172 + $0x5c] sm:$0xf] %vm1123, %v1114
      %1148 = vst.msk [vmem:[%s172 + $0x60] sm:$0xf] %vm1123, %v1115
      %1149 = vst.msk [vmem:[%s172 + $0x64] sm:$0xf] %vm1123, %v1116
      %1150 = vst.msk [vmem:[%s172 + $0x68] sm:$0xf] %vm1123, %v1117
      %1151 = vst.msk [vmem:[%s172 + $0x6c] sm:$0xf] %vm1123, %v1118
      %1152 = vst.msk [vmem:[%s172 + $0x70] sm:$0xf] %vm1123, %v1119
      %1153 = vst.msk [vmem:[%s172 + $0x74] sm:$0xf] %vm1123, %v1120
      %1154 = vst.msk [vmem:[%s172 + $0x78] sm:$0xf] %vm1123, %v1121
      %1155 = vst.msk [vmem:[%s172 + $0x7c] sm:$0xf] %vm1123, %v1122
      %s1156 = smul.u32 32, %s14
      %p1157 = scmp.lt.s32.totalorder %s1156, 63
      %s1158 = scalar_select %p1157, %s1156, 63
      %s1159 = smul.addr %s1158, 4
      %s1160 = scalar_lea.vmem %s3, %s1159
      // Predicated region
      $region33: #{tpu_custom_call.1} parent=31 // pred_check
        %p1161 = pneg %p100
      $region34: #{tpu_custom_call.1} parent=31 // pred_check_branch
        %1163 = sbr.rel (%p1161) target = $region36
      $region35: #{tpu_custom_call.1} parent=31 // pred_region
        %s1164 = smul.u32 32, %s14
      $region36: #{tpu_custom_call.1} parent=31 // pred_fallthru
        _
    $region32: #{tpu_custom_call.1} parent=5 // pred_fallthru
      _
    %p1165 = scmp.le.s32.totalorder 2, %s9
    // Predicated region
    $region37: #{tpu_custom_call.1} parent=5 // pred_check
      %p1166 = pneg %p1165
    $region38: #{tpu_custom_call.1} parent=5 // pred_check_branch
      %1168 = sbr.rel (%p1166) target = $region40
    $region39: #{tpu_custom_call.1} parent=5 // pred_region
      %s1169 = ssub.s32 %s9, 2
      // Predicated region
      $region41: #{tpu_custom_call.1} parent=39 // pred_check
        %p1170 = pneg %p106
      $region42: #{tpu_custom_call.1} parent=39 // pred_check_branch
        %1172 = sbr.rel (%p1170) target = $region44
      $region43: #{tpu_custom_call.1} parent=39 // pred_region
        %s1173 = smul.u32 32, %s15
        %p1174 = scmp.lt.s32.totalorder %s1173, 63
        %s1175 = scalar_select %p1174, %s1173, 63
        %s1176 = smul.addr %s1175, 4
        %s1177 = scalar_lea.vmem %s3, %s1176
      $region44: #{tpu_custom_call.1} parent=39 // pred_fallthru
        _
    $region40: #{tpu_custom_call.1} parent=5 // pred_fallthru
      _
  $region6: #{tpu_custom_call.1} parent=0 // loop_footer
    %s13 = sadd.s32 1, %s9
  $region7: #{tpu_custom_call.1} parent=0 // loop_footer_branch
    %8 = sbr.rel target = $region3
  $region8: #{tpu_custom_call.1} parent=0 // loop_exit
    _

</llo_original>
